<compile_context>
chip_gen: v6e
topology: v6e:2x2x1
jax: 0.10.0
libtpu: 0.0.40
codegen_flags: <defaults>
</compile_context>

<pallas_src>
import numpy as np
import jax
import jax.numpy as jnp
from jax.experimental import pallas as pl
from jax.experimental.pallas import tpu as pltpu

IN_F = 15
OUT_F = 20
POOL = 3


def adaptive_pool_matrix(in_size, out_size):
    """M (out, in) with M @ v == AdaptiveAvgPool1d(out)(v), PyTorch bins:
    start = floor(i*in/out), end = ceil((i+1)*in/out)."""
    m = np.zeros((out_size, in_size), dtype=np.float32)
    for i in range(out_size):
        start = (i * in_size) // out_size
        end = -((-(i + 1) * in_size) // out_size)
        m[i, start:end] = 1.0 / (end - start)
    return m


def _cdiv(a, b):
    return -(-a // b)


def _round_up(a, b):
    return _cdiv(a, b) * b


def _bb_max():
    """Largest allowed batch block per TPU generation (VMEM budget)."""
    try:
        kind = jax.devices()[0].device_kind.lower()
    except Exception:
        return 4096
    if "v7" in kind:                     # 64 MiB VMEM per TensorCore
        return 4096
    if "v5" in kind or "v6" in kind:     # 128 MiB VMEM
        return 8192
    return 4096                          # conservative default elsewhere


def _choose_bb(B, bb_max):
    """Batch rows per grid step: multiple of 8, <= bb_max, and >= 2 blocks
    for medium/large batches so both v7x TensorCores get work."""
    B8 = _round_up(max(B, 1), 8)
    if B8 <= bb_max:
        if B8 >= 1024:                   # split so megacore gets 2 blocks
            return _round_up(_cdiv(B8, 2), 8)
        return B8
    nblk = _cdiv(B8, bb_max)
    return _round_up(_cdiv(B8, nblk), 8)


def m_linear_kernel(x_ref, y_ref, mx_ref, my_ref, b_ref, o_ref):
    # out = x_flat @ Mx + y_flat @ My + bias   (single fused affine map)
    acc = jnp.dot(x_ref[...], mx_ref[...], preferred_element_type=jnp.float32)
    acc = acc + jnp.dot(y_ref[...], my_ref[...],
                        preferred_element_type=jnp.float32)
    o_ref[...] = (acc + b_ref[...]).astype(o_ref.dtype)


@jax.jit
def m_linear_forward(x, y, w1, b1, w2, b2):
    """x, y: (N, C, H, 15) f32.  Returns (N, C, 3, 3) f32.

    PyTorch eval-mode semantics: z = linear2(y) + dropout(linear1(x)) with
    dropout acting as identity, then AdaptiveAvgPool2d(3) over (H, 20).
    """
    N, C, H, K = x.shape
    assert K == IN_F and y.shape == x.shape and H >= 1
    B = N * C
    HK = H * IN_F
    PP = POOL * POOL

    # Free reshapes (metadata only): (N,C,H,15) -> (B, H*15); flat index
    # h*15 + k matches the folded weight layout below.
    xf = x.reshape(B, HK)
    yf = y.reshape(B, HK)

    # Host-side folding of the whole affine pipeline:
    #   z[b,h,w]   = (x[b,h] @ W1.T + b1 + y[b,h] @ W2.T + b2)[w]
    #   out[b,p,q] = sum_{h,w} ph[p,h] * pw[q,w] * z[b,h,w]
    # => out = xf @ Mx + yf @ My + bias, where
    #   Mx[h*15+k, p*3+q] = ph[p,h] * (W1.T @ pw.T)[k,q]     (same for My/W2)
    #   bias[p*3+q]       = ((b1+b2) @ pw.T)[q]   (rows of ph sum to 1)
    ph = jnp.asarray(adaptive_pool_matrix(H, POOL))        # (3, H)
    pw = jnp.asarray(adaptive_pool_matrix(OUT_F, POOL))    # (3, 20)
    wpx = w1.T @ pw.T                                      # (15, 3)
    wpy = w2.T @ pw.T                                      # (15, 3)
    mx = jnp.einsum("ph,kq->hkpq", ph, wpx).reshape(HK, PP)
    my = jnp.einsum("ph,kq->hkpq", ph, wpy).reshape(HK, PP)
    bias = jnp.tile((b1 + b2) @ pw.T, POOL).reshape(1, PP)

    BB = _choose_bb(B, _bb_max())
    grid = (_cdiv(B, BB),)

    # VMEM budget: 2 inputs x 2 pipeline buffers x BB rows x padded lanes,
    # plus output double-buffer and small resident constants, plus headroom.
    hk_pad = _round_up(HK, 128)
    pp_pad = _round_up(PP, 128)
    vmem_bytes = (2 * 2 * BB * hk_pad + 2 * BB * pp_pad) * 4 + (8 << 20)
    vmem_bytes = min(vmem_bytes, 100 << 20)

    cost = pl.CostEstimate(
        flops=4 * B * HK * PP,
        transcendentals=0,
        bytes_accessed=(2 * B * HK + B * PP + 2 * HK * PP + PP) * 4,
    )

    out = pl.pallas_call(
        m_linear_kernel,
        out_shape=jax.ShapeDtypeStruct((B, PP), jnp.float32),
        grid=grid,
        in_specs=[
            pl.BlockSpec((BB, HK), lambda i: (i, 0)),      # x slab
            pl.BlockSpec((BB, HK), lambda i: (i, 0)),      # y slab
            pl.BlockSpec((HK, PP), lambda i: (0, 0)),      # Mx (resident)
            pl.BlockSpec((HK, PP), lambda i: (0, 0)),      # My (resident)
            pl.BlockSpec((1, PP), lambda i: (0, 0)),       # bias (resident)
        ],
        out_specs=pl.BlockSpec((BB, PP), lambda i: (i, 0)),
        compiler_params=pltpu.CompilerParams(
            dimension_semantics=("parallel",),
            vmem_limit_bytes=vmem_bytes,
        ),
        cost_estimate=cost,
    )(xf, yf, mx, my, bias)

    return out.reshape(N, C, POOL, POOL)


def reference_forward(x, y, w1, b1, w2, b2):
    """Plain-JAX reference matching PyTorch eval-mode semantics."""
    h1 = jnp.einsum("nchk,ok->ncho", x, w1) + b1
    h2 = jnp.einsum("nchk,ok->ncho", y, w2) + b2
    z = h2 + h1                                            # (N, C, H, 20)
    H, W = z.shape[-2], z.shape[-1]
    ph = jnp.asarray(adaptive_pool_matrix(H, POOL))
    pw = jnp.asarray(adaptive_pool_matrix(W, POOL))
    return jnp.einsum("ph,nchw,qw->ncpq", ph, z, pw)


if __name__ == "__main__":
    key = jax.random.PRNGKey(0)
    k_x, k_y, k_w1, k_b1, k_w2, k_b2, k_x2, k_y2 = jax.random.split(key, 8)

    # Deterministic parameter init (PyTorch-Linear-style uniform bounds).
    bound = 1.0 / np.sqrt(IN_F)
    w1 = jax.random.uniform(k_w1, (OUT_F, IN_F), jnp.float32, -bound, bound)
    b1 = jax.random.uniform(k_b1, (OUT_F,), jnp.float32, -bound, bound)
    w2 = jax.random.uniform(k_w2, (OUT_F, IN_F), jnp.float32, -bound, bound)
    b2 = jax.random.uniform(k_b2, (OUT_F,), jnp.float32, -bound, bound)

    # Case 1: small, 8-aligned batch (N*C = 8).
    N, C, H = 2, 4, 9
    x = jax.random.normal(k_x, (N, C, H, IN_F), dtype=jnp.float32)
    y = jax.random.normal(k_y, (N, C, H, IN_F), dtype=jnp.float32)
    out = jax.block_until_ready(m_linear_forward(x, y, w1, b1, w2, b2))
    ref = jax.block_until_ready(reference_forward(x, y, w1, b1, w2, b2))
    assert out.shape == (N, C, POOL, POOL)
    np.testing.assert_allclose(np.asarray(out), np.asarray(ref),
                               rtol=1e-4, atol=1e-5)

    # Case 2: batch not a multiple of 8 (N*C = 21) -> exercises the partial
    # final block (masked OOB writes) with no host-side padding copy.
    N2, C2, H2 = 3, 7, 5
    x2 = jax.random.normal(k_x2, (N2, C2, H2, IN_F), dtype=jnp.float32)
    y2 = jax.random.normal(k_y2, (N2, C2, H2, IN_F), dtype=jnp.float32)
    out2 = jax.block_until_ready(m_linear_forward(x2, y2, w1, b1, w2, b2))
    ref2 = jax.block_until_ready(reference_forward(x2, y2, w1, b1, w2, b2))
    np.testing.assert_allclose(np.asarray(out2), np.asarray(ref2),
                               rtol=1e-4, atol=1e-5)

    print("KERNEL_OK")
</pallas_src>

<mosaic_0001>
module attributes {stable_mosaic.version = 11 : i64} {
  func.func @m_linear_kernel(%arg0: i32, %arg1: memref<8x135xf32, #tpu.memory_space<vmem>>, %arg2: memref<8x135xf32, #tpu.memory_space<vmem>>, %arg3: memref<135x9xf32, #tpu.memory_space<vmem>>, %arg4: memref<135x9xf32, #tpu.memory_space<vmem>>, %arg5: memref<1x9xf32, #tpu.memory_space<vmem>>, %arg6: memref<8x9xf32, #tpu.memory_space<vmem>>) attributes {dimension_semantics = [#tpu.dimension_semantics<parallel>], iteration_bounds = array<i64: 1>, scalar_prefetch = 0 : i64, scratch_operands = 0 : i64, tpu.core_type = #tpu.core_type<tc>, window_params = [{transform_indices = @transform_0, window_bounds = array<i64: 8, 135>}, {transform_indices = @transform_1, window_bounds = array<i64: 8, 135>}, {pipeline_mode = #tpu.pipeline_mode<synchronous>, transform_indices = @transform_2, window_bounds = array<i64: 135, 9>}, {pipeline_mode = #tpu.pipeline_mode<synchronous>, transform_indices = @transform_3, window_bounds = array<i64: 135, 9>}, {pipeline_mode = #tpu.pipeline_mode<synchronous>, transform_indices = @transform_4, window_bounds = array<i64: 1, 9>}, {transform_indices = @transform_5, window_bounds = array<i64: 8, 9>}]} {
    %c0 = arith.constant 0 : index
    %c0_0 = arith.constant 0 : index
    %0 = vector.load %arg1[%c0, %c0_0] : memref<8x135xf32, #tpu.memory_space<vmem>>, vector<8x135xf32>
    %c0_1 = arith.constant 0 : index
    %c0_2 = arith.constant 0 : index
    %1 = vector.load %arg3[%c0_1, %c0_2] : memref<135x9xf32, #tpu.memory_space<vmem>>, vector<135x9xf32>
    %cst = arith.constant dense<0.000000e+00> : vector<8x9xf32>
    %2 = tpu.matmul %0, %1, %cst {dimension_numbers = #tpu.dot_dimension_numbers<[1], [0], [0], [1], [0, 0, 1, 1], [], []>} : vector<8x135xf32>, vector<135x9xf32>, vector<8x9xf32> -> vector<8x9xf32>
    %c0_3 = arith.constant 0 : index
    %c0_4 = arith.constant 0 : index
    %3 = vector.load %arg2[%c0_3, %c0_4] : memref<8x135xf32, #tpu.memory_space<vmem>>, vector<8x135xf32>
    %c0_5 = arith.constant 0 : index
    %c0_6 = arith.constant 0 : index
    %4 = vector.load %arg4[%c0_5, %c0_6] : memref<135x9xf32, #tpu.memory_space<vmem>>, vector<135x9xf32>
    %cst_7 = arith.constant dense<0.000000e+00> : vector<8x9xf32>
    %5 = tpu.matmul %3, %4, %cst_7 {dimension_numbers = #tpu.dot_dimension_numbers<[1], [0], [0], [1], [0, 0, 1, 1], [], []>} : vector<8x135xf32>, vector<135x9xf32>, vector<8x9xf32> -> vector<8x9xf32>
    %6 = arith.addf %2, %5 : vector<8x9xf32>
    %c0_8 = arith.constant 0 : index
    %c0_9 = arith.constant 0 : index
    %7 = vector.load %arg5[%c0_8, %c0_9] : memref<1x9xf32, #tpu.memory_space<vmem>>, vector<1x9xf32>
    %8 = vector.broadcast %7 : vector<1x9xf32> to vector<8x9xf32>
    %9 = arith.addf %6, %8 : vector<8x9xf32>
    %c0_10 = arith.constant 0 : index
    %c0_11 = arith.constant 0 : index
    %10 = vector.load %arg6[%c0_10, %c0_11] : memref<8x9xf32, #tpu.memory_space<vmem>>, vector<8x9xf32>
    tpu.vector_store %arg6[%c0_10, %c0_11], %9 {strides = array<i32>} : memref<8x9xf32, #tpu.memory_space<vmem>>, vector<8x9xf32>,
    return
  }
  func.func @transform_0(%arg0: i32) -> (i32, i32) {
    %c0_i32 = arith.constant 0 : i32
    %c0_i32_0 = arith.constant 0 : i32
    return %arg0, %c0_i32 : i32, i32
  }
  func.func @transform_1(%arg0: i32) -> (i32, i32) {
    %c0_i32 = arith.constant 0 : i32
    %c0_i32_0 = arith.constant 0 : i32
    return %arg0, %c0_i32 : i32, i32
  }
  func.func @transform_2(%arg0: i32) -> (i32, i32) {
    %c0_i32 = arith.constant 0 : i32
    %c0_i32_0 = arith.constant 0 : i32
    %c0_i32_1 = arith.constant 0 : i32
    return %c0_i32, %c0_i32_0 : i32, i32
  }
  func.func @transform_3(%arg0: i32) -> (i32, i32) {
    %c0_i32 = arith.constant 0 : i32
    %c0_i32_0 = arith.constant 0 : i32
    %c0_i32_1 = arith.constant 0 : i32
    return %c0_i32, %c0_i32_0 : i32, i32
  }
  func.func @transform_4(%arg0: i32) -> (i32, i32) {
    %c0_i32 = arith.constant 0 : i32
    %c0_i32_0 = arith.constant 0 : i32
    %c0_i32_1 = arith.constant 0 : i32
    return %c0_i32, %c0_i32_0 : i32, i32
  }
  func.func @transform_5(%arg0: i32) -> (i32, i32) {
    %c0_i32 = arith.constant 0 : i32
    %c0_i32_0 = arith.constant 0 : i32
    return %arg0, %c0_i32 : i32, i32
  }
}

</mosaic_0001>

<llo_original>
// kernel: tile.8
$region0: #{tile.8}
  #allocation0 [shape = 's32[1]{0}', space=sflag, size = 0x4, scoped, tag = 'scoped memory for tile.8']
  %s0 = inlined_call_operand.vmem [shape: f32[3], index: 0, kind: input, shape index: {}]
  %s1 = inlined_call_operand.vmem [shape: f32[3,3], index: 1, kind: output, shape index: {}]
  // Predicated region
  $region2: #{tile.8} parent=0 // pred_check
    _
  $region3: #{tile.8} parent=0 // pred_check_branch
    %3 = sbr.rel (0) target = $region5
  $region4: #{tile.8} parent=0 // pred_region
    _
  $region5: #{tile.8} parent=0 // pred_fallthru
    _
  %v4 = vld [vmem:[%s0] ss:$0 sm:$0xff]
  %5 = vst [vmem:[%s1] sm:$0xf] %v4

// kernel: tile.9
$region0: #{tile.9}
  %s0 = inlined_call_operand.vmem [shape: f32[3,3], index: 0, kind: input, shape index: {}]
  %s1 = inlined_call_operand.vmem [shape: f32[1,9], index: 1, kind: output, shape index: {}]
  $region1: #{tile.9} parent=0
    #allocation0 [shape = 'u8[4096]{0}', space=vmem, size = 0x1000, scoped, tag = 'scoped mem for output reshape']
    #allocation1 [shape = 'u8[4096]{0}', space=vmem, size = 0x1000, scoped, tag = 'scoped mem for input reshape']
    %s3 = sshll.u32 1, 4
    %s4 = ssub.s32 %s3, 1
    %v5 = vld [vmem:[%s0] sm:%s4]
    %6 = vst [vmem:[#allocation1] sm:%s4] %v5
    %v7 = vld [vmem:[#allocation1] sm:$0x1]
    %vm8 = vcmask 23552
    %9 = vst.msk [vmem:[#allocation0] sm:$0x1] %vm8, %v7
    %s10 = scalar_lea.vmem [#allocation1], 2
    %v11 = vld [vmem:[%s10] sm:$0x1]
    %12 = vrot.lane.b32.xlu0 %v11, 6
    %v13 = vpop.permute.xlu0 %12
    %vm14 = vcmask 72752
    %15 = vst.msk [vmem:[#allocation0] sm:$0x1] %vm14, %v13
    %s16 = scalar_lea.vmem [#allocation1], 1
    %v17 = vld [vmem:[%s16] sm:$0x1]
    %18 = vrot.lane.b32.xlu0 %v17, 3
    %v19 = vpop.permute.xlu0 %18
    %vm20 = vcmask 48152
    %21 = vst.msk [vmem:[#allocation0] sm:$0x1] %vm20, %v19
    %s23 = sshll.u32 1, 1
    %s24 = ssub.s32 %s23, 1
    %v26 = vld [vmem:[#allocation0] sm:%s24]
    %s27 = sshll.u32 1, 1
    %s28 = ssub.s32 %s27, 1
    %29 = vst [vmem:[%s1] sm:%s28] %v26

// kernel: m_linear_forward.1
$region0: #{m_linear_forward.1}
  #allocation0 [shape = 'u32[]', space=smem, size = 0x4, offset = 0x4, fixed_abs, tag = 'smem constant byte address 0x4 - core index']
  #allocation1 [shape = 'u32[144,128]{1,0:T(1,128)}', space=vmem, size = 0x12000, scoped, tag = 'internal scratch']
  %s0 = inlined_call_operand.vmem [shape: f32[8,135], index: 0, kind: input, shape index: {}]
  %s1 = inlined_call_operand.vmem [shape: f32[8,135], index: 1, kind: input, shape index: {}]
  %s2 = inlined_call_operand.vmem [shape: f32[135,9], index: 2, kind: input, shape index: {}]
  %s3 = inlined_call_operand.vmem [shape: f32[135,9], index: 3, kind: input, shape index: {}]
  %s4 = inlined_call_operand.vmem [shape: f32[1,9], index: 4, kind: input, shape index: {}]
  %s5 = inlined_call_operand.vmem [shape: f32[8,9], index: 5, kind: output, shape index: {}]
  %s6 = sld [smem:[#allocation0]]
  $region30: #{m_linear_forward.1} parent=0
    _
  %s8 = ssub.s32 1, %s6
  %s9 = scalar_select 0, %s8, %s6
  // Predicated region
  $region2: #{m_linear_forward.1} parent=0 // pred_check
    _
  $region3: #{m_linear_forward.1} parent=0 // pred_check_branch
    %11 = sbr.rel (0) target = $region5
  $region4: #{m_linear_forward.1} parent=0 // pred_region
    _
  $region5: #{m_linear_forward.1} parent=0 // pred_fallthru
    _
  // Predicated region
  $region6: #{m_linear_forward.1} parent=0 // pred_check
    _
  $region7: #{m_linear_forward.1} parent=0 // pred_check_branch
    %13 = sbr.rel (0) target = $region9
  $region8: #{m_linear_forward.1} parent=0 // pred_region
    _
  $region9: #{m_linear_forward.1} parent=0 // pred_fallthru
    _
  // Predicated region
  $region10: #{m_linear_forward.1} parent=0 // pred_check
    _
  $region11: #{m_linear_forward.1} parent=0 // pred_check_branch
    %15 = sbr.rel (0) target = $region13
  $region12: #{m_linear_forward.1} parent=0 // pred_region
    _
  $region13: #{m_linear_forward.1} parent=0 // pred_fallthru
    _
  // Predicated region
  $region14: #{m_linear_forward.1} parent=0 // pred_check
    _
  $region15: #{m_linear_forward.1} parent=0 // pred_check_branch
    %17 = sbr.rel (0) target = $region17
  $region16: #{m_linear_forward.1} parent=0 // pred_region
    _
  $region17: #{m_linear_forward.1} parent=0 // pred_fallthru
    _
  // Predicated region
  $region18: #{m_linear_forward.1} parent=0 // pred_check
    _
  $region19: #{m_linear_forward.1} parent=0 // pred_check_branch
    %19 = sbr.rel (0) target = $region21
  $region20: #{m_linear_forward.1} parent=0 // pred_region
    _
  $region21: #{m_linear_forward.1} parent=0 // pred_fallthru
    _
  %v20 = vld [vmem:[%s0] sm:$0xff]
  %v21 = vld [vmem:[%s0 + $0x8] sm:$0xff]
  %v22 = vld [vmem:[%s2] sm:$0xff]
  %v23 = vld [vmem:[%s2 + $0x8] sm:$0xff]
  %v24 = vld [vmem:[%s2 + $0x10] sm:$0xff]
  %v25 = vld [vmem:[%s2 + $0x18] sm:$0xff]
  %v26 = vld [vmem:[%s2 + $0x20] sm:$0xff]
  %v27 = vld [vmem:[%s2 + $0x28] sm:$0xff]
  %v28 = vld [vmem:[%s2 + $0x30] sm:$0xff]
  %v29 = vld [vmem:[%s2 + $0x38] sm:$0xff]
  %v30 = vld [vmem:[%s2 + $0x40] sm:$0xff]
  %v31 = vld [vmem:[%s2 + $0x48] sm:$0xff]
  %v32 = vld [vmem:[%s2 + $0x50] sm:$0xff]
  %v33 = vld [vmem:[%s2 + $0x58] sm:$0xff]
  %v34 = vld [vmem:[%s2 + $0x60] sm:$0xff]
  %v35 = vld [vmem:[%s2 + $0x68] sm:$0xff]
  %v36 = vld [vmem:[%s2 + $0x70] sm:$0xff]
  %v37 = vld [vmem:[%s2 + $0x78] sm:$0xff]
  %v38 = vld [vmem:[%s2 + $0x80] sm:$0x7f]
  %v39 = vld [vmem:[%s1] sm:$0xff]
  %v40 = vld [vmem:[%s1 + $0x8] sm:$0xff]
  %v41 = vld [vmem:[%s3] sm:$0xff]
  %v42 = vld [vmem:[%s3 + $0x8] sm:$0xff]
  %v43 = vld [vmem:[%s3 + $0x10] sm:$0xff]
  %v44 = vld [vmem:[%s3 + $0x18] sm:$0xff]
  %v45 = vld [vmem:[%s3 + $0x20] sm:$0xff]
  %v46 = vld [vmem:[%s3 + $0x28] sm:$0xff]
  %v47 = vld [vmem:[%s3 + $0x30] sm:$0xff]
  %v48 = vld [vmem:[%s3 + $0x38] sm:$0xff]
  %v49 = vld [vmem:[%s3 + $0x40] sm:$0xff]
  %v50 = vld [vmem:[%s3 + $0x48] sm:$0xff]
  %v51 = vld [vmem:[%s3 + $0x50] sm:$0xff]
  %v52 = vld [vmem:[%s3 + $0x58] sm:$0xff]
  %v53 = vld [vmem:[%s3 + $0x60] sm:$0xff]
  %v54 = vld [vmem:[%s3 + $0x68] sm:$0xff]
  %v55 = vld [vmem:[%s3 + $0x70] sm:$0xff]
  %v56 = vld [vmem:[%s3 + $0x78] sm:$0xff]
  %v57 = vld [vmem:[%s3 + $0x80] sm:$0x7f]
  %vm58 = vcmask 56320
  %v60 = vsel %vm58, %v40, 0
  %vm62 = vcmask 1046528
  %v64 = vsel %vm62, %v57, 0
  %66 = vmatprep.subr.mxu0 0.0
  %67 = vmatpush1.msra.mxu0 %v56
  %68 = vmatprep.subr.mxu0 0.0
  %69 = vmatpush1.msra.mxu0 %v55
  %70 = vmatprep.subr.mxu0 0.0
  %71 = vmatpush1.msra.mxu0 %v54
  %72 = vmatprep.subr.mxu0 0.0
  %73 = vmatpush1.msra.mxu0 %v53
  %74 = vmatprep.subr.mxu0 0.0
  %75 = vmatpush1.msra.mxu0 %v52
  %76 = vmatprep.subr.mxu0 0.0
  %77 = vmatpush1.msra.mxu0 %v51
  %78 = vmatprep.subr.mxu0 0.0
  %79 = vmatpush1.msra.mxu0 %v50
  %80 = vmatprep.subr.mxu0 0.0
  %81 = vmatpush1.msra.mxu0 %v49
  %82 = vmatprep.subr.mxu0 0.0
  %83 = vmatpush1.msra.mxu0 %v48
  %84 = vmatprep.subr.mxu0 0.0
  %85 = vmatpush1.msra.mxu0 %v47
  %86 = vmatprep.subr.mxu0 0.0
  %87 = vmatpush1.msra.mxu0 %v46
  %88 = vmatprep.subr.mxu0 0.0
  %89 = vmatpush1.msra.mxu0 %v45
  %90 = vmatprep.subr.mxu0 0.0
  %91 = vmatpush1.msra.mxu0 %v44
  %92 = vmatprep.subr.mxu0 0.0
  %93 = vmatpush1.msra.mxu0 %v43
  %94 = vmatprep.subr.mxu0 0.0
  %95 = vmatpush1.msra.mxu0 %v42
  %96 = vmatprep.subr.mxu0 0.0
  %97 = vmatpush1.msra.mxu0 %v41
  %98 = vmatprep.subr.mxu0 0.0
  %99 = vmatpush2.msra.mxu0 0.0
  %100 = vmatprep.subr.mxu0 0.0
  %101 = vmatpush2.msra.mxu0 0.0
  %102 = vmatprep.subr.mxu0 0.0
  %103 = vmatpush2.msra.mxu0 0.0
  %104 = vmatprep.subr.mxu0 0.0
  %105 = vmatpush2.msra.mxu0 0.0
  %106 = vmatprep.subr.mxu0 0.0
  %107 = vmatpush2.msra.mxu0 0.0
  %108 = vmatprep.subr.mxu0 0.0
  %109 = vmatpush2.msra.mxu0 0.0
  %110 = vmatprep.subr.mxu0 0.0
  %111 = vmatpush2.msra.mxu0 0.0
  %112 = vmatprep.subr.mxu0 0.0
  %113 = vmatpush2.msra.mxu0 0.0
  %114 = vmatprep.subr.mxu0 0.0
  %115 = vmatpush2.msra.mxu0 0.0
  %116 = vmatprep.subr.mxu0 0.0
  %117 = vmatpush2.msra.mxu0 0.0
  %118 = vmatprep.subr.mxu0 0.0
  %119 = vmatpush2.msra.mxu0 0.0
  %120 = vmatprep.subr.mxu0 0.0
  %121 = vmatpush2.msra.mxu0 0.0
  %122 = vmatprep.subr.mxu0 0.0
  %123 = vmatpush2.msra.mxu0 0.0
  %124 = vmatprep.subr.mxu0 0.0
  %125 = vmatpush2.msra.mxu0 0.0
  %126 = vmatprep.subr.mxu0 0.0
  %127 = vmatpush2.msra.mxu0 0.0
  %128 = vmatprep.subr.mxu0 0.0
  %129 = vmatpush2.msra.mxu0 %v64
  %130 = vmatprep.mubr.f32.mxu0 %v60
  %131 = vmatmul.mubr.f32.gmra.mxu0 %v39
  %v132 = vpop.f32.mrf.mxu0
  %v133 = vadd.f32 0.0, %v132
  %v134 = vpop.f32.mrf.mxu0
  %135 = vdwg.mxu0
  %v137 = vsel %vm58, %v21, 0
  %v140 = vsel %vm62, %v38, 0
  %142 = vmatprep.subr.mxu0 0.0
  %143 = vmatpush1.msra.mxu0 %v37
  %144 = vmatprep.subr.mxu0 0.0
  %145 = vmatpush1.msra.mxu0 %v36
  %146 = vmatprep.subr.mxu0 0.0
  %147 = vmatpush1.msra.mxu0 %v35
  %148 = vmatprep.subr.mxu0 0.0
  %149 = vmatpush1.msra.mxu0 %v34
  %150 = vmatprep.subr.mxu0 0.0
  %151 = vmatpush1.msra.mxu0 %v33
  %152 = vmatprep.subr.mxu0 0.0
  %153 = vmatpush1.msra.mxu0 %v32
  %154 = vmatprep.subr.mxu0 0.0
  %155 = vmatpush1.msra.mxu0 %v31
  %156 = vmatprep.subr.mxu0 0.0
  %157 = vmatpush1.msra.mxu0 %v30
  %158 = vmatprep.subr.mxu0 0.0
  %159 = vmatpush1.msra.mxu0 %v29
  %160 = vmatprep.subr.mxu0 0.0
  %161 = vmatpush1.msra.mxu0 %v28
  %162 = vmatprep.subr.mxu0 0.0
  %163 = vmatpush1.msra.mxu0 %v27
  %164 = vmatprep.subr.mxu0 0.0
  %165 = vmatpush1.msra.mxu0 %v26
  %166 = vmatprep.subr.mxu0 0.0
  %167 = vmatpush1.msra.mxu0 %v25
  %168 = vmatprep.subr.mxu0 0.0
  %169 = vmatpush1.msra.mxu0 %v24
  %170 = vmatprep.subr.mxu0 0.0
  %171 = vmatpush1.msra.mxu0 %v23
  %172 = vmatprep.subr.mxu0 0.0
  %173 = vmatpush1.msra.mxu0 %v22
  %174 = vmatprep.subr.mxu0 0.0
  %175 = vmatpush2.msra.mxu0 0.0
  %176 = vmatprep.subr.mxu0 0.0
  %177 = vmatpush2.msra.mxu0 0.0
  %178 = vmatprep.subr.mxu0 0.0
  %179 = vmatpush2.msra.mxu0 0.0
  %180 = vmatprep.subr.mxu0 0.0
  %181 = vmatpush2.msra.mxu0 0.0
  %182 = vmatprep.subr.mxu0 0.0
  %183 = vmatpush2.msra.mxu0 0.0
  %184 = vmatprep.subr.mxu0 0.0
  %185 = vmatpush2.msra.mxu0 0.0
  %186 = vmatprep.subr.mxu0 0.0
  %187 = vmatpush2.msra.mxu0 0.0
  %188 = vmatprep.subr.mxu0 0.0
  %189 = vmatpush2.msra.mxu0 0.0
  %190 = vmatprep.subr.mxu0 0.0
  %191 = vmatpush2.msra.mxu0 0.0
  %192 = vmatprep.subr.mxu0 0.0
  %193 = vmatpush2.msra.mxu0 0.0
  %194 = vmatprep.subr.mxu0 0.0
  %195 = vmatpush2.msra.mxu0 0.0
  %196 = vmatprep.subr.mxu0 0.0
  %197 = vmatpush2.msra.mxu0 0.0
  %198 = vmatprep.subr.mxu0 0.0
  %199 = vmatpush2.msra.mxu0 0.0
  %200 = vmatprep.subr.mxu0 0.0
  %201 = vmatpush2.msra.mxu0 0.0
  %202 = vmatprep.subr.mxu0 0.0
  %203 = vmatpush2.msra.mxu0 0.0
  %204 = vmatprep.subr.mxu0 0.0
  %205 = vmatpush2.msra.mxu0 %v140
  %206 = vmatprep.mubr.f32.mxu0 %v137
  %207 = vmatmul.mubr.f32.gmra.mxu0 %v20
  %v208 = vpop.f32.mrf.mxu0
  %v209 = vadd.f32 %v133, %v208
  %v210 = vpop.f32.mrf.mxu0
  %211 = vdwg.mxu0
  %v212 = vld [vmem:[%s4] sm:$0x1]
  %v214 = vlaneseq
  %v215 = vshrl.u32 %v214, 7
  %v216 = vsub.s32 0, %v215
  %v217 = vrot.slane %v212, %v216
  %v219 = vadd.f32 %v209, %v217
  %vm220 = vcmask 72704
  %221 = vst.msk [vmem:[%s5] sm:$0xff] %vm220, %v219
  // Predicated region
  $region22: #{m_linear_forward.1} parent=0 // pred_check
    _
  $region23: #{m_linear_forward.1} parent=0 // pred_check_branch
    %223 = sbr.rel (0) target = $region25
  $region24: #{m_linear_forward.1} parent=0 // pred_region
    _
  $region25: #{m_linear_forward.1} parent=0 // pred_fallthru
    _
  // Predicated region
  $region26: #{m_linear_forward.1} parent=0 // pred_check
    _
  $region27: #{m_linear_forward.1} parent=0 // pred_check_branch
    %225 = sbr.rel (0) target = $region29
  $region28: #{m_linear_forward.1} parent=0 // pred_region
    _
  $region29: #{m_linear_forward.1} parent=0 // pred_fallthru
    _

</llo_original>
